<compile_context>
chip_gen: v7x
topology: tpu7x:2x2x1
jax: 0.10.0
libtpu: 0.0.40
codegen_flags: <defaults>
</compile_context>

<pallas_src>
import math
import functools

import jax
import jax.numpy as jnp
from jax import lax
from jax.experimental import pallas as pl
from jax.experimental.pallas import tpu as pltpu


def _normhead_kernel(x_ref, w_ref, o_ref, wn_ref, *, n_chunks, row_chunk, eps):
    # x_ref:  (tm, H)   activation tile (native dtype, e.g. bf16)
    # w_ref:  (tv, H)   raw weight tile
    # o_ref:  (tm, tv)  output logits tile
    # wn_ref: (tv, H)   VMEM scratch: L2-normalized weight tile (resident across M tiles)
    #
    # Grid = (vocab tiles, m tiles); m is the inner axis, so program_id(1) == 0 marks the
    # first visit of a fresh vocab tile: (re)build the normalized weights exactly once.
    @pl.when(pl.program_id(1) == 0)
    def _():
        def body(c, carry):
            r0 = pl.multiple_of(c * row_chunk, row_chunk)
            wc = w_ref[pl.ds(r0, row_chunk), :].astype(jnp.float32)   # (rc, H) f32
            sq = jnp.sum(wc * wc, axis=1, keepdims=True)              # (rc, 1)
            # F.normalize: w / max(||w||, eps)  ==  w * rsqrt(max(||w||^2, eps^2))
            inv = lax.rsqrt(jnp.maximum(sq, eps * eps))               # EUP rsqrt
            wn_ref[pl.ds(r0, row_chunk), :] = (wc * inv).astype(wn_ref.dtype)
            return carry

        lax.fori_loop(0, n_chunks, body, 0)

    # Native-dtype MXU matmul with f32 accumulation; normalized weights come from the
    # resident scratch, so there is zero per-step normalization work.
    acc = lax.dot_general(
        x_ref[...], wn_ref[...],
        dimension_numbers=(((1,), (1,)), ((), ())),
        preferred_element_type=jnp.float32,
    )                                                                 # (tm, tv) f32
    o_ref[...] = acc.astype(o_ref.dtype)


def _pick_m_tile(m, tm):
    """Token-axis tile: full array if it fits, else a multiple-of-8 divisor of the
    8-aligned padded M that is <= tm."""
    if m <= tm:
        return m, m
    m_pad = pl.cdiv(m, 8) * 8
    for cand in range(tm, 7, -8):
        if m_pad % cand == 0:
            return cand, m_pad
    return 8, m_pad


def _pick_v_tile(vocab, tv):
    """Vocab-axis tile: full array if it fits, else a multiple-of-128 divisor of the
    128-aligned padded vocab that is <= tv (lane-dense, unmasked stores)."""
    if vocab <= tv:
        return vocab, vocab
    v_pad = pl.cdiv(vocab, 128) * 128
    for cand in range(tv, 127, -128):
        if v_pad % cand == 0:
            return cand, v_pad
    return 128, v_pad


def _pick_row_chunk(tv, hidden, max_bytes=4 * 1024 * 1024):
    """Row chunk for the once-per-vocab-tile norm pass: bounds the (chunk, H) f32 temp."""
    for c in (512, 256, 128, 64, 32, 16, 8):
        if tv % c == 0 and c * hidden * 4 <= max_bytes:
            return c
    return tv


def norm_head(hidden_states: jax.Array, weight: jax.Array, *, tm: int = 256,
              tv: int = 512) -> jax.Array:
    """hidden_states: (..., hidden); weight: (vocab, hidden) -> (..., vocab)."""
    *lead, hidden = hidden_states.shape
    vocab, hidden_w = weight.shape
    assert hidden == hidden_w, (hidden, hidden_w)

    # Matmul runs in the activations' native dtype (keep weights bf16 in HBM for the
    # HBM-bound decode case); the norm itself is always computed in f32 in-kernel.
    if weight.dtype != hidden_states.dtype:
        weight = weight.astype(hidden_states.dtype)

    m = 1
    for d in lead:
        m *= d
    x2d = hidden_states.reshape(m, hidden)

    tm_eff, m_pad = _pick_m_tile(m, tm)
    tv_eff, v_pad = _pick_v_tile(vocab, tv)

    if m_pad != m:
        x2d = jnp.pad(x2d, ((0, m_pad - m), (0, 0)))
    w = weight if v_pad == vocab else jnp.pad(weight, ((0, v_pad - vocab), (0, 0)))

    row_chunk = _pick_row_chunk(tv_eff, hidden)
    n_chunks = tv_eff // row_chunk

    kernel = functools.partial(
        _normhead_kernel, n_chunks=n_chunks, row_chunk=row_chunk, eps=1e-12)

    grid = (v_pad // tv_eff, m_pad // tm_eff)   # vocab outer (parallel), m inner

    out2d = pl.pallas_call(
        kernel,
        out_shape=jax.ShapeDtypeStruct((m_pad, v_pad), hidden_states.dtype),
        grid_spec=pltpu.PrefetchScalarGridSpec(
            num_scalar_prefetch=0,
            grid=grid,
            in_specs=[
                pl.BlockSpec((tm_eff, hidden), lambda j, i: (i, 0)),   # activations
                pl.BlockSpec((tv_eff, hidden), lambda j, i: (j, 0)),   # raw weights
            ],
            out_specs=pl.BlockSpec((tm_eff, tv_eff), lambda j, i: (i, j)),
            scratch_shapes=[pltpu.VMEM((tv_eff, hidden), w.dtype)],    # normalized W tile
        ),
        compiler_params=pltpu.CompilerParams(
            dimension_semantics=("parallel", "arbitrary"),
            vmem_limit_bytes=48 * 1024 * 1024,
        ),
    )(x2d, w)

    if m_pad != m or v_pad != vocab:
        out2d = out2d[:m, :vocab]
    return out2d.reshape(*lead, vocab)


def _reference(x2d, weight):
    norm = jnp.maximum(
        jnp.sqrt(jnp.sum(weight * weight, axis=-1, keepdims=True)), 1e-12)
    return x2d @ (weight / norm).T


if __name__ == "__main__":
    key = jax.random.PRNGKey(0)
    k_x, k_w, k_x2, k_w2 = jax.random.split(key, 4)

    # ---- Test 1: float32, tiles smaller than the arrays so the (vocab, m) grid,
    # the pl.when norm-caching and multi-tile writeback paths are all exercised. ----
    batch, seq, hidden, vocab = 2, 8, 32, 256
    bound = 1.0 / math.sqrt(hidden)  # kaiming_uniform_(a=sqrt(5)) => U(+/- 1/sqrt(fan_in))
    weight = jax.random.uniform(k_w, (vocab, hidden), jnp.float32, -bound, bound)
    hidden_states = jax.random.normal(k_x, (batch, seq, hidden), jnp.float32)

    fn = jax.jit(functools.partial(norm_head, tm=8, tv=128))
    out = jax.block_until_ready(fn(hidden_states, weight))

    ref = _reference(hidden_states.reshape(-1, hidden), weight).reshape(batch, seq, vocab)
    assert out.shape == (batch, seq, vocab), out.shape
    # Tolerance allows for the MXU's default (reduced-precision-pass) f32 matmul; a real
    # bug (missing / wrong-axis normalization, tiling error) produces O(0.1-1) errors.
    assert jnp.allclose(out, ref, atol=2e-2, rtol=2e-2), \
        float(jnp.max(jnp.abs(out - ref)))

    # ---- Test 2: bfloat16 (production dtype) with ragged m/vocab to exercise the
    # padding path (zero weight rows / zero activation rows are sliced away). ----
    batch2, seq2, hidden2, vocab2 = 2, 9, 32, 320
    bound2 = 1.0 / math.sqrt(hidden2)
    w2 = jax.random.uniform(k_w2, (vocab2, hidden2), jnp.float32,
                            -bound2, bound2).astype(jnp.bfloat16)
    x2 = jax.random.normal(k_x2, (batch2, seq2, hidden2),
                           jnp.float32).astype(jnp.bfloat16)

    fn2 = jax.jit(functools.partial(norm_head, tm=8, tv=128))
    out2 = jax.block_until_ready(fn2(x2, w2))
    ref2 = _reference(x2.reshape(-1, hidden2).astype(jnp.float32),
                      w2.astype(jnp.float32)).reshape(batch2, seq2, vocab2)
    assert out2.shape == (batch2, seq2, vocab2), out2.shape
    assert jnp.allclose(out2.astype(jnp.float32), ref2, atol=6e-2, rtol=6e-2), \
        float(jnp.max(jnp.abs(out2.astype(jnp.float32) - ref2)))

    print("KERNEL_OK")
</pallas_src>

<mosaic_0001>
module attributes {stable_mosaic.version = 11 : i64} {
  func.func @_normhead_kernel(%arg0: i32, %arg1: i32, %arg2: memref<8x32xf32, #tpu.memory_space<vmem>>, %arg3: memref<128x32xf32, #tpu.memory_space<vmem>>, %arg4: memref<8x128xf32, #tpu.memory_space<vmem>>, %arg5: memref<128x32xf32, #tpu.memory_space<vmem>>) attributes {dimension_semantics = [#tpu.dimension_semantics<parallel>, #tpu.dimension_semantics<arbitrary>], iteration_bounds = array<i64: 2, 2>, scalar_prefetch = 0 : i64, scratch_operands = 1 : i64, tpu.core_type = #tpu.core_type<tc>, window_params = [{transform_indices = @transform_0, window_bounds = array<i64: 8, 32>}, {transform_indices = @transform_1, window_bounds = array<i64: 128, 32>}, {transform_indices = @transform_2, window_bounds = array<i64: 8, 128>}]} {
    %c0_i32 = arith.constant 0 : i32
    %0 = arith.cmpi eq, %arg1, %c0_i32 : i32
    %1 = arith.extui %0 : i1 to i32
    %c0_i32_0 = arith.constant 0 : i32
    %2 = arith.cmpi ne, %1, %c0_i32_0 : i32
    scf.if %2 {
      %c0_i32_6 = arith.constant 0 : i32
      %c128_i32 = arith.constant 128 : i32
      %7 = arith.muli %c0_i32_6, %c128_i32 : i32
      %8 = tpu.assume_multiple %7, 128 : i32
      %9 = arith.index_cast %8 : i32 to index
      %c0_7 = arith.constant 0 : index
      %10 = vector.load %arg3[%9, %c0_7] : memref<128x32xf32, #tpu.memory_space<vmem>>, vector<128x32xf32>
      %11 = arith.mulf %10, %10 : vector<128x32xf32>
      %cst_8 = arith.constant dense<0.000000e+00> : vector<128xf32>
      %12 = vector.multi_reduction <add>, %11, %cst_8 [1] : vector<128x32xf32> to vector<128xf32>
      %13 = vector.shape_cast %12 : vector<128xf32> to vector<128x1xf32>
      %cst_9 = arith.constant 1.000000e-24 : f32
      %14 = vector.broadcast %cst_9 : f32 to vector<128x1xf32>
      %15 = arith.maximumf %13, %14 : vector<128x1xf32>
      %16 = math.rsqrt %15 : vector<128x1xf32>
      %17 = vector.broadcast %16 : vector<128x1xf32> to vector<128x32xf32>
      %18 = arith.mulf %10, %17 : vector<128x32xf32>
      %19 = arith.index_cast %8 : i32 to index
      %c0_10 = arith.constant 0 : index
      %20 = vector.load %arg5[%19, %c0_10] : memref<128x32xf32, #tpu.memory_space<vmem>>, vector<128x32xf32>
      tpu.vector_store %arg5[%19, %c0_10], %18 {strides = array<i32>} : memref<128x32xf32, #tpu.memory_space<vmem>>, vector<128x32xf32>,
      %c1_i32 = arith.constant 1 : i32
    } else {
    }
    %c0 = arith.constant 0 : index
    %c0_1 = arith.constant 0 : index
    %3 = vector.load %arg2[%c0, %c0_1] : memref<8x32xf32, #tpu.memory_space<vmem>>, vector<8x32xf32>
    %c0_2 = arith.constant 0 : index
    %c0_3 = arith.constant 0 : index
    %4 = vector.load %arg5[%c0_2, %c0_3] : memref<128x32xf32, #tpu.memory_space<vmem>>, vector<128x32xf32>
    %cst = arith.constant dense<0.000000e+00> : vector<8x128xf32>
    %5 = tpu.matmul %3, %4, %cst {dimension_numbers = #tpu.dot_dimension_numbers<[1], [1], [0], [0], [0, 0, 1, 0], [], []>} : vector<8x32xf32>, vector<128x32xf32>, vector<8x128xf32> -> vector<8x128xf32>
    %c0_4 = arith.constant 0 : index
    %c0_5 = arith.constant 0 : index
    %6 = vector.load %arg4[%c0_4, %c0_5] : memref<8x128xf32, #tpu.memory_space<vmem>>, vector<8x128xf32>
    tpu.vector_store %arg4[%c0_4, %c0_5], %5 {strides = array<i32>} : memref<8x128xf32, #tpu.memory_space<vmem>>, vector<8x128xf32>,
    return
  }
  func.func @transform_0(%arg0: i32, %arg1: i32) -> (i32, i32) {
    %c0_i32 = arith.constant 0 : i32
    %c0_i32_0 = arith.constant 0 : i32
    return %arg1, %c0_i32 : i32, i32
  }
  func.func @transform_1(%arg0: i32, %arg1: i32) -> (i32, i32) {
    %c0_i32 = arith.constant 0 : i32
    %c0_i32_0 = arith.constant 0 : i32
    return %arg0, %c0_i32 : i32, i32
  }
  func.func @transform_2(%arg0: i32, %arg1: i32) -> (i32, i32) {
    %c0_i32 = arith.constant 0 : i32
    return %arg1, %arg0 : i32, i32
  }
}

</mosaic_0001>

<llo_original>
// kernel: norm_head.1
$region0: #{norm_head.1}
  #allocation0 [shape = 'u32[]', space=smem, size = 0x4, offset = 0x4, fixed_abs, tag = 'smem constant byte address 0x4 - core index']
  #allocation1 [shape = 'u32[144,128]{1,0:T(1,128)}', space=vmem, size = 0x12000, scoped, tag = 'internal scratch']
  #allocation2 [shape = 'f32[128,32]{1,0:T(8,128)}', space=vmem, size = 0x10000, scoped, tag = 'scratch operand']
  %s0 = inlined_call_operand.vmem [shape: f32[16,32], index: 0, kind: input, shape index: {}]
  %s1 = inlined_call_operand.vmem [shape: f32[256,32], index: 1, kind: input, shape index: {}]
  %s2 = inlined_call_operand.hbm [shape: f32[16,256], index: 2, kind: output, shape index: {}]
  %s3 = sld [smem:[#allocation0]]
  $region45: #{norm_head.1} parent=0
    _
  %s5 = ssub.s32 1, %s3
  %s6 = scalar_select 0, %s5, %s3
  $region1: #{norm_head.1} parent=0
    #allocation3 [shape = 'u8[8192]{0}', space=vmem, size = 0x2000, scoped, tag = 'output window, operand 0']
    #allocation4 [shape = 's32[2]{0}', space=sflag, size = 0x8, scoped, tag = 'scoped memory for norm_head.1']
    %7 = vsyncpa [#allocation4], 0
    %s8 = scalar_lea.sflag [#allocation4], 1
    %9 = vsyncpa %s8, 0
    loop: start=0, step=1, limit=6
    $region2: #{norm_head.1} parent=1 // loop_pre_header
      _
    $region3: #{norm_head.1} parent=1 // loop_header
      %s11 = sphi 0, %s15
      %p12 = scmp.ge.s32.totalorder %s11, 6
      %s18 = sphi 0, %s30
      %s19 = sphi 0, %s26
      %s20 = sphi 0, %s18
      %s21 = sphi 0, %s19
      %s22 = sphi 0, %s20
      %s23 = sphi 0, %s21
      %s33 = sphi 0, %s35
      %s36 = sphi 0, %s33
      %s37 = sphi 0, %s36
      %s53 = sphi 0, %s37
      %s59 = sphi 0, %s61
      %s62 = sphi 0, %s59
      %s63 = sphi 0, %s62
      %s79 = sphi 0, %s63
      %s87 = sphi 0, %s89
      %s90 = sphi 0, %s87
      %s91 = sphi 0, %s90
      %s107 = sphi 0, %s91
    $region4: #{norm_head.1} parent=1 // loop_header_branch
      %14 = sbr.rel (%p12) target = $region8
    $region5: #{norm_head.1} parent=1 // loop_body
      %s16 = ssub.s32 %s11, 1
      %s17 = ssub.s32 %s11, 2
      %s24 = sadd.s32 1, %s19
      %p25 = scmp.ge.s32.totalorder %s24, 2
      %s26 = scalar_select %p25, 0, %s24
      %s27 = sadd.s32 1, %s18
      %s28 = scalar_select %p25, %s27, %s18
      %p29 = scmp.ge.s32.totalorder %s28, 2
      %s30 = scalar_select %p29, 0, %s28
      %s31 = ssub.s32 %s19, %s26
      %p32 = scmp.eq.s32.totalorder %s31, 0
      %s34 = sadd.s32 %s33, 1
      %s35 = scalar_select %p32, %s33, %s34
      %p38 = pneg %p32
      %p39 = scmp.eq.s32.totalorder %s11, 3
      %p40 = por %p38, %p39
      %p41 = scmp.ne.s32.totalorder %s33, %s36
      %p42 = scmp.eq.s32.totalorder %s11, 0
      %p43 = por %p41, %p42
      %p44 = scmp.ne.s32.totalorder %s33, %s36
      %p45 = scmp.eq.s32.totalorder %s16, 3
      %p46 = por %p44, %p45
      %p47 = scmp.ne.s32.totalorder %s36, %s37
      %p48 = scmp.eq.s32.totalorder %s16, 0
      %p49 = por %p47, %p48
      %p50 = scmp.ne.s32.totalorder %s36, %s37
      %p51 = scmp.eq.s32.totalorder %s17, 3
      %p52 = por %p50, %p51
      %p54 = scmp.ne.s32.totalorder %s37, %s53
      %p55 = scmp.eq.s32.totalorder %s17, 0
      %p56 = por %p54, %p55
      %s57 = ssub.s32 %s18, %s30
      %p58 = scmp.eq.s32.totalorder %s57, 0
      %s60 = sadd.s32 %s59, 1
      %s61 = scalar_select %p58, %s59, %s60
      %p64 = pneg %p58
      %p65 = scmp.eq.s32.totalorder %s11, 3
      %p66 = por %p64, %p65
      %p67 = scmp.ne.s32.totalorder %s59, %s62
      %p68 = scmp.eq.s32.totalorder %s11, 0
      %p69 = por %p67, %p68
      %p70 = scmp.ne.s32.totalorder %s59, %s62
      %p71 = scmp.eq.s32.totalorder %s16, 3
      %p72 = por %p70, %p71
      %p73 = scmp.ne.s32.totalorder %s62, %s63
      %p74 = scmp.eq.s32.totalorder %s16, 0
      %p75 = por %p73, %p74
      %p76 = scmp.ne.s32.totalorder %s62, %s63
      %p77 = scmp.eq.s32.totalorder %s17, 3
      %p78 = por %p76, %p77
      %p80 = scmp.ne.s32.totalorder %s63, %s79
      %p81 = scmp.eq.s32.totalorder %s17, 0
      %p82 = por %p80, %p81
      %s83 = ssub.s32 %s19, %s26
      %s84 = ssub.s32 %s18, %s30
      %s85 = sor.u32 %s83, %s84
      %p86 = scmp.eq.s32.totalorder %s85, 0
      %s88 = sadd.s32 %s87, 1
      %s89 = scalar_select %p86, %s87, %s88
      %p92 = pneg %p86
      %p93 = scmp.eq.s32.totalorder %s11, 3
      %p94 = por %p92, %p93
      %p95 = scmp.ne.s32.totalorder %s87, %s90
      %p96 = scmp.eq.s32.totalorder %s11, 0
      %p97 = por %p95, %p96
      %p98 = scmp.ne.s32.totalorder %s87, %s90
      %p99 = scmp.eq.s32.totalorder %s16, 3
      %p100 = por %p98, %p99
      %p101 = scmp.ne.s32.totalorder %s90, %s91
      %p102 = scmp.eq.s32.totalorder %s16, 0
      %p103 = por %p101, %p102
      %p104 = scmp.ne.s32.totalorder %s90, %s91
      %p105 = scmp.eq.s32.totalorder %s17, 3
      %p106 = por %p104, %p105
      %p108 = scmp.ne.s32.totalorder %s91, %s107
      %p109 = scmp.eq.s32.totalorder %s17, 0
      %p110 = por %p108, %p109
      %p111 = scmp.le.s32.totalorder 1, %s11
      %p112 = scmp.lt.s32.totalorder %s11, 5
      %p113 = pnand %p111, %p112
      %p114 = pneg %p113
      // Predicated region
      $region9: #{norm_head.1} parent=5 // pred_check
        _
      $region10: #{norm_head.1} parent=5 // pred_check_branch
        %116 = sbr.rel (%p113) target = $region12
      $region11: #{norm_head.1} parent=5 // pred_region
        %s117 = ssub.s32 %s11, 1
      $region12: #{norm_head.1} parent=5 // pred_fallthru
        _
      %p118 = scmp.lt.s32.totalorder %s11, 4
      // Predicated region
      $region13: #{norm_head.1} parent=5 // pred_check
        %p119 = pneg %p118
      $region14: #{norm_head.1} parent=5 // pred_check_branch
        %121 = sbr.rel (%p119) target = $region16
      $region15: #{norm_head.1} parent=5 // pred_region
        // Predicated region
        $region17: #{norm_head.1} parent=15 // pred_check
          %p122 = pneg %p43
        $region18: #{norm_head.1} parent=15 // pred_check_branch
          %124 = sbr.rel (%p122) target = $region20
        $region19: #{norm_head.1} parent=15 // pred_region
          %p125 = scmp.lt.s32.totalorder %s19, 1
          %s126 = scalar_select %p125, %s19, 1
          %s127 = smul.addr %s126, 8
          %s128 = scalar_lea.vmem %s0, %s127
        $region20: #{norm_head.1} parent=15 // pred_fallthru
          _
        // Predicated region
        $region21: #{norm_head.1} parent=15 // pred_check
          %p129 = pneg %p69
        $region22: #{norm_head.1} parent=15 // pred_check_branch
          %131 = sbr.rel (%p129) target = $region24
        $region23: #{norm_head.1} parent=15 // pred_region
          %s132 = smul.u32 16, %s18
          %p133 = scmp.lt.s32.totalorder %s132, 31
          %s134 = scalar_select %p133, %s132, 31
          %s135 = smul.addr %s134, 8
          %s136 = scalar_lea.vmem %s1, %s135
          %s137 = smul.u32 16, %s18
        $region24: #{norm_head.1} parent=15 // pred_fallthru
          _
      $region16: #{norm_head.1} parent=5 // pred_fallthru
        _
      %p138 = scmp.le.s32.totalorder 1, %s11
      %p139 = scmp.lt.s32.totalorder %s11, 5
      %p140 = pnand %p138, %p139
      %p141 = pneg %p140
      // Predicated region
      $region25: #{norm_head.1} parent=5 // pred_check
        _
      $region26: #{norm_head.1} parent=5 // pred_check_branch
        %143 = sbr.rel (%p140) target = $region28
      $region27: #{norm_head.1} parent=5 // pred_region
        %s144 = ssub.s32 %s11, 1
        %p145 = scmp.lt.s32.totalorder %s21, 1
        %s146 = scalar_select %p145, %s21, 1
        %s147 = smul.addr %s146, 8
        %s148 = scalar_lea.vmem %s0, %s147
        %p149 = pneg %p49
        %p150 = pneg %p46
        %s151 = smul.u32 16, %s20
        %p152 = scmp.lt.s32.totalorder %s151, 31
        %s153 = scalar_select %p152, %s151, 31
        %s154 = smul.addr %s153, 8
        %s155 = scalar_lea.vmem %s1, %s154
        %p156 = pneg %p75
        %p157 = pneg %p72
        %p158 = pneg %p103
        %p159 = pneg %p100
        %s160 = sand.u32 %s90, 1
        %s161 = scalar_lea.sflag [#allocation4], %s160
        %s162 = sand.u32 %s90, 1
        %s163 = smul.addr %s162, 8
        %s164 = scalar_lea.vmem [#allocation3], %s163
        %p165 = scmp.lt.s32.totalorder %s21, 1
        %s166 = scalar_select %p165, %s21, 1
        %s167 = smul.addr %s166, 8
        %s168 = scalar_lea.vmem %s0, %s167
        %s169 = smul.u32 16, %s20
        %p170 = scmp.lt.s32.totalorder %s169, 31
        %s171 = scalar_select %p170, %s169, 31
        %s172 = smul.addr %s171, 8
        %s173 = scalar_lea.vmem %s1, %s172
        %s174 = smul.u32 16, %s20
        %p175 = scmp.eq.s32.totalorder %s21, 0
        // Predicated region
        $region29: #{norm_head.1} parent=27 // pred_check
          %p176 = pneg %p175
        $region30: #{norm_head.1} parent=27 // pred_check_branch
          %178 = sbr.rel (%p176) target = $region32
        $region31: #{norm_head.1} parent=27 // pred_region
          %v179 = vld [vmem:[%s173] sm:$0xff]
          %v180 = vld [vmem:[%s173 + $0x8] sm:$0xff]
          %v181 = vld [vmem:[%s173 + $0x10] sm:$0xff]
          %v182 = vld [vmem:[%s173 + $0x18] sm:$0xff]
          %v183 = vld [vmem:[%s173 + $0x20] sm:$0xff]
          %v184 = vld [vmem:[%s173 + $0x28] sm:$0xff]
          %v185 = vld [vmem:[%s173 + $0x30] sm:$0xff]
          %v186 = vld [vmem:[%s173 + $0x38] sm:$0xff]
          %v187 = vld [vmem:[%s173 + $0x40] sm:$0xff]
          %v188 = vld [vmem:[%s173 + $0x48] sm:$0xff]
          %v189 = vld [vmem:[%s173 + $0x50] sm:$0xff]
          %v190 = vld [vmem:[%s173 + $0x58] sm:$0xff]
          %v191 = vld [vmem:[%s173 + $0x60] sm:$0xff]
          %v192 = vld [vmem:[%s173 + $0x68] sm:$0xff]
          %v193 = vld [vmem:[%s173 + $0x70] sm:$0xff]
          %v194 = vld [vmem:[%s173 + $0x78] sm:$0xff]
          %v195 = vmul.f32 %v179, %v179
          %v196 = vmul.f32 %v180, %v180
          %v197 = vmul.f32 %v181, %v181
          %v198 = vmul.f32 %v182, %v182
          %v199 = vmul.f32 %v183, %v183
          %v200 = vmul.f32 %v184, %v184
          %v201 = vmul.f32 %v185, %v185
          %v202 = vmul.f32 %v186, %v186
          %v203 = vmul.f32 %v187, %v187
          %v204 = vmul.f32 %v188, %v188
          %v205 = vmul.f32 %v189, %v189
          %v206 = vmul.f32 %v190, %v190
          %v207 = vmul.f32 %v191, %v191
          %v208 = vmul.f32 %v192, %v192
          %v209 = vmul.f32 %v193, %v193
          %v210 = vmul.f32 %v194, %v194
          %vm211 = vcmask 261120
          %v212 = vsel %vm211, %v195, 0.0
          %213 = vadd.xlane.f32.xlu0 %v212
          %v214 = vpop.xlane.xlu0 %213
          %v215 = vsel %vm211, %v196, 0.0
          %216 = vadd.xlane.f32.xlu0 %v215
          %v217 = vpop.xlane.xlu0 %216
          %v218 = vsel %vm211, %v197, 0.0
          %219 = vadd.xlane.f32.xlu0 %v218
          %v220 = vpop.xlane.xlu0 %219
          %v221 = vsel %vm211, %v198, 0.0
          %222 = vadd.xlane.f32.xlu0 %v221
          %v223 = vpop.xlane.xlu0 %222
          %v224 = vsel %vm211, %v199, 0.0
          %225 = vadd.xlane.f32.xlu0 %v224
          %v226 = vpop.xlane.xlu0 %225
          %v227 = vsel %vm211, %v200, 0.0
          %228 = vadd.xlane.f32.xlu0 %v227
          %v229 = vpop.xlane.xlu0 %228
          %v230 = vsel %vm211, %v201, 0.0
          %231 = vadd.xlane.f32.xlu0 %v230
          %v232 = vpop.xlane.xlu0 %231
          %v233 = vsel %vm211, %v202, 0.0
          %234 = vadd.xlane.f32.xlu0 %v233
          %v235 = vpop.xlane.xlu0 %234
          %v236 = vsel %vm211, %v203, 0.0
          %237 = vadd.xlane.f32.xlu0 %v236
          %v238 = vpop.xlane.xlu0 %237
          %v239 = vsel %vm211, %v204, 0.0
          %240 = vadd.xlane.f32.xlu0 %v239
          %v241 = vpop.xlane.xlu0 %240
          %v242 = vsel %vm211, %v205, 0.0
          %243 = vadd.xlane.f32.xlu0 %v242
          %v244 = vpop.xlane.xlu0 %243
          %v245 = vsel %vm211, %v206, 0.0
          %246 = vadd.xlane.f32.xlu0 %v245
          %v247 = vpop.xlane.xlu0 %246
          %v248 = vsel %vm211, %v207, 0.0
          %249 = vadd.xlane.f32.xlu0 %v248
          %v250 = vpop.xlane.xlu0 %249
          %v251 = vsel %vm211, %v208, 0.0
          %252 = vadd.xlane.f32.xlu0 %v251
          %v253 = vpop.xlane.xlu0 %252
          %v254 = vsel %vm211, %v209, 0.0
          %255 = vadd.xlane.f32.xlu0 %v254
          %v256 = vpop.xlane.xlu0 %255
          %v257 = vsel %vm211, %v210, 0.0
          %258 = vadd.xlane.f32.xlu0 %v257
          %v259 = vpop.xlane.xlu0 %258
          %v260 = vmax.f32 %v214, 1e-24
          %v261 = vmax.f32 %v217, 1e-24
          %v262 = vmax.f32 %v220, 1e-24
          %v263 = vmax.f32 %v223, 1e-24
          %v264 = vmax.f32 %v226, 1e-24
          %v265 = vmax.f32 %v229, 1e-24
          %v266 = vmax.f32 %v232, 1e-24
          %v267 = vmax.f32 %v235, 1e-24
          %v268 = vmax.f32 %v238, 1e-24
          %v269 = vmax.f32 %v241, 1e-24
          %v270 = vmax.f32 %v244, 1e-24
          %v271 = vmax.f32 %v247, 1e-24
          %v272 = vmax.f32 %v250, 1e-24
          %v273 = vmax.f32 %v253, 1e-24
          %v274 = vmax.f32 %v256, 1e-24
          %v275 = vmax.f32 %v259, 1e-24
          %v276 = vrsqrt.pop %v260
          %v277 = vrsqrt.pop %v261
          %v278 = vrsqrt.pop %v262
          %v279 = vrsqrt.pop %v263
          %v280 = vrsqrt.pop %v264
          %v281 = vrsqrt.pop %v265
          %v282 = vrsqrt.pop %v266
          %v283 = vrsqrt.pop %v267
          %v284 = vrsqrt.pop %v268
          %v285 = vrsqrt.pop %v269
          %v286 = vrsqrt.pop %v270
          %v287 = vrsqrt.pop %v271
          %v288 = vrsqrt.pop %v272
          %v289 = vrsqrt.pop %v273
          %v290 = vrsqrt.pop %v274
          %v291 = vrsqrt.pop %v275
          %v292 = vmul.f32 %v179, %v276
          %v293 = vmul.f32 %v180, %v277
          %v294 = vmul.f32 %v181, %v278
          %v295 = vmul.f32 %v182, %v279
          %v296 = vmul.f32 %v183, %v280
          %v297 = vmul.f32 %v184, %v281
          %v298 = vmul.f32 %v185, %v282
          %v299 = vmul.f32 %v186, %v283
          %v300 = vmul.f32 %v187, %v284
          %v301 = vmul.f32 %v188, %v285
          %v302 = vmul.f32 %v189, %v286
          %v303 = vmul.f32 %v190, %v287
          %v304 = vmul.f32 %v191, %v288
          %v305 = vmul.f32 %v192, %v289
          %v306 = vmul.f32 %v193, %v290
          %v307 = vmul.f32 %v194, %v291
          %308 = vst.msk [vmem:[#allocation2] sm:$0xff] %vm211, %v292
          %309 = vst.msk [vmem:[#allocation2 + $0x8] sm:$0xff] %vm211, %v293
          %310 = vst.msk [vmem:[#allocation2 + $0x10] sm:$0xff] %vm211, %v294
          %311 = vst.msk [vmem:[#allocation2 + $0x18] sm:$0xff] %vm211, %v295
          %312 = vst.msk [vmem:[#allocation2 + $0x20] sm:$0xff] %vm211, %v296
          %313 = vst.msk [vmem:[#allocation2 + $0x28] sm:$0xff] %vm211, %v297
          %314 = vst.msk [vmem:[#allocation2 + $0x30] sm:$0xff] %vm211, %v298
          %315 = vst.msk [vmem:[#allocation2 + $0x38] sm:$0xff] %vm211, %v299
          %316 = vst.msk [vmem:[#allocation2 + $0x40] sm:$0xff] %vm211, %v300
          %317 = vst.msk [vmem:[#allocation2 + $0x48] sm:$0xff] %vm211, %v301
          %318 = vst.msk [vmem:[#allocation2 + $0x50] sm:$0xff] %vm211, %v302
          %319 = vst.msk [vmem:[#allocation2 + $0x58] sm:$0xff] %vm211, %v303
          %320 = vst.msk [vmem:[#allocation2 + $0x60] sm:$0xff] %vm211, %v304
          %321 = vst.msk [vmem:[#allocation2 + $0x68] sm:$0xff] %vm211, %v305
          %322 = vst.msk [vmem:[#allocation2 + $0x70] sm:$0xff] %vm211, %v306
          %323 = vst.msk [vmem:[#allocation2 + $0x78] sm:$0xff] %vm211, %v307
        $region32: #{norm_head.1} parent=27 // pred_fallthru
          _
        %v324 = vld [vmem:[%s168] sm:$0xff]
        %v325 = vld [vmem:[#allocation2] sm:$0xff]
        %v326 = vld [vmem:[#allocation2 + $0x8] sm:$0xff]
        %v327 = vld [vmem:[#allocation2 + $0x10] sm:$0xff]
        %v328 = vld [vmem:[#allocation2 + $0x18] sm:$0xff]
        %v329 = vld [vmem:[#allocation2 + $0x20] sm:$0xff]
        %v330 = vld [vmem:[#allocation2 + $0x28] sm:$0xff]
        %v331 = vld [vmem:[#allocation2 + $0x30] sm:$0xff]
        %v332 = vld [vmem:[#allocation2 + $0x38] sm:$0xff]
        %v333 = vld [vmem:[#allocation2 + $0x40] sm:$0xff]
        %v334 = vld [vmem:[#allocation2 + $0x48] sm:$0xff]
        %v335 = vld [vmem:[#allocation2 + $0x50] sm:$0xff]
        %v336 = vld [vmem:[#allocation2 + $0x58] sm:$0xff]
        %v337 = vld [vmem:[#allocation2 + $0x60] sm:$0xff]
        %v338 = vld [vmem:[#allocation2 + $0x68] sm:$0xff]
        %v339 = vld [vmem:[#allocation2 + $0x70] sm:$0xff]
        %v340 = vld [vmem:[#allocation2 + $0x78] sm:$0xff]
        %vm341 = vcmask 261120
        %v343 = vsel %vm341, %v324, 0
        %v346 = vsel %vm341, %v325, 0
        %v349 = vsel %vm341, %v326, 0
        %v352 = vsel %vm341, %v327, 0
        %v355 = vsel %vm341, %v328, 0
        %v358 = vsel %vm341, %v329, 0
        %v361 = vsel %vm341, %v330, 0
        %v364 = vsel %vm341, %v331, 0
        %v367 = vsel %vm341, %v332, 0
        %v370 = vsel %vm341, %v333, 0
        %v373 = vsel %vm341, %v334, 0
        %v376 = vsel %vm341, %v335, 0
        %v379 = vsel %vm341, %v336, 0
        %v382 = vsel %vm341, %v337, 0
        %v385 = vsel %vm341, %v338, 0
        %v388 = vsel %vm341, %v339, 0
        %v391 = vsel %vm341, %v340, 0
        %393 = vmatprep.subr.mxu0 0.0
        %394 = vmatpush1.xpose.msra.mxu0 %v346
        %395 = vmatprep.subr.mxu0 0.0
        %396 = vmatpush1.xpose.msra.mxu0 %v349
        %397 = vmatprep.subr.mxu0 0.0
        %398 = vmatpush1.xpose.msra.mxu0 %v352
        %399 = vmatprep.subr.mxu0 0.0
        %400 = vmatpush1.xpose.msra.mxu0 %v355
        %401 = vmatprep.subr.mxu0 0.0
        %402 = vmatpush1.xpose.msra.mxu0 %v358
        %403 = vmatprep.subr.mxu0 0.0
        %404 = vmatpush1.xpose.msra.mxu0 %v361
        %405 = vmatprep.subr.mxu0 0.0
        %406 = vmatpush1.xpose.msra.mxu0 %v364
        %407 = vmatprep.subr.mxu0 0.0
        %408 = vmatpush1.xpose.msra.mxu0 %v367
        %409 = vmatprep.subr.mxu0 0.0
        %410 = vmatpush1.xpose.msra.mxu0 %v370
        %411 = vmatprep.subr.mxu0 0.0
        %412 = vmatpush1.xpose.msra.mxu0 %v373
        %413 = vmatprep.subr.mxu0 0.0
        %414 = vmatpush1.xpose.msra.mxu0 %v376
        %415 = vmatprep.subr.mxu0 0.0
        %416 = vmatpush1.xpose.msra.mxu0 %v379
        %417 = vmatprep.subr.mxu0 0.0
        %418 = vmatpush1.xpose.msra.mxu0 %v382
        %419 = vmatprep.subr.mxu0 0.0
        %420 = vmatpush1.xpose.msra.mxu0 %v385
        %421 = vmatprep.subr.mxu0 0.0
        %422 = vmatpush1.xpose.msra.mxu0 %v388
        %423 = vmatprep.subr.mxu0 0.0
        %424 = vmatpush1.xpose.msra.mxu0 %v391
        %425 = vmatprep.subr.mxu0 0.0
        %426 = vmatpush1.xpose.msra.mxu0 0.0
        %427 = vmatprep.subr.mxu0 0.0
        %428 = vmatpush1.xpose.msra.mxu0 0.0
        %429 = vmatprep.subr.mxu0 0.0
        %430 = vmatpush1.xpose.msra.mxu0 0.0
        %431 = vmatprep.subr.mxu0 0.0
        %432 = vmatpush1.xpose.msra.mxu0 0.0
        %433 = vmatprep.subr.mxu0 0.0
        %434 = vmatpush1.xpose.msra.mxu0 0.0
        %435 = vmatprep.subr.mxu0 0.0
        %436 = vmatpush1.xpose.msra.mxu0 0.0
        %437 = vmatprep.subr.mxu0 0.0
        %438 = vmatpush1.xpose.msra.mxu0 0.0
        %439 = vmatprep.subr.mxu0 0.0
        %440 = vmatpush1.xpose.msra.mxu0 0.0
        %441 = vmatprep.subr.mxu0 0.0
        %442 = vmatpush1.xpose.msra.mxu0 0.0
        %443 = vmatprep.subr.mxu0 0.0
        %444 = vmatpush1.xpose.msra.mxu0 0.0
        %445 = vmatprep.subr.mxu0 0.0
        %446 = vmatpush1.xpose.msra.mxu0 0.0
        %447 = vmatprep.subr.mxu0 0.0
        %448 = vmatpush1.xpose.msra.mxu0 0.0
        %449 = vmatprep.subr.mxu0 0.0
        %450 = vmatpush1.xpose.msra.mxu0 0.0
        %451 = vmatprep.subr.mxu0 0.0
        %452 = vmatpush1.xpose.msra.mxu0 0.0
        %453 = vmatprep.subr.mxu0 0.0
        %454 = vmatpush1.xpose.msra.mxu0 0.0
        %455 = vmatprep.subr.mxu0 0.0
        %456 = vmatpush1.xpose.msra.mxu0 0.0
        %457 = vmatprep.mubr.f32.mxu0 0.0
        %458 = vmatmul.mubr.f32.gmra.mrb[0].mxu0 %v343
        %v459 = vpop.f32.mrb[0].mxu0
        %v460 = vadd.f32 0.0, %v459
        %v461 = vpop.f32.mrb[0].mxu0
        %462 = vdwg.mxu0
        %463 = vst [vmem:[%s164] sm:$0xff] %v460
        %s464 = sand.u32 %s90, 1
        %s465 = scalar_lea.sflag [#allocation4], %s464
        %s466 = sand.u32 %s90, 1
        %s467 = smul.addr %s466, 8
        %s468 = scalar_lea.vmem [#allocation3], %s467
        // Predicated region
        $region33: #{norm_head.1} parent=27 // pred_check
          %p469 = pneg %p100
        $region34: #{norm_head.1} parent=27 // pred_check_branch
          %471 = sbr.rel (%p469) target = $region36
        $region35: #{norm_head.1} parent=27 // pred_region
          %s473 = ssub.s32 128, 128
          %474 = vsyncadd %s465, %s473
          %s475 = smul.addr %s21, 2
          %s476 = sadd.s32 %s20, %s475
          %s477 = smul.addr %s476, 128
          %s478 = scalar_lea.hbm %s2, %s477
          %s480 = sshll.u32 %s468, 4
          %s481 = int_to_ptr.vmem [resolvable:$true] %s480
          %483 = dma.vmem_to_hbm [thread:$0]  %s481, 128, %s478, %s465
        $region36: #{norm_head.1} parent=27 // pred_fallthru
          _
      $region28: #{norm_head.1} parent=5 // pred_fallthru
        _
      %p484 = scmp.le.s32.totalorder 2, %s11
      // Predicated region
      $region37: #{norm_head.1} parent=5 // pred_check
        %p485 = pneg %p484
      $region38: #{norm_head.1} parent=5 // pred_check_branch
        %487 = sbr.rel (%p485) target = $region40
      $region39: #{norm_head.1} parent=5 // pred_region
        %s488 = ssub.s32 %s11, 2
        // Predicated region
        $region41: #{norm_head.1} parent=39 // pred_check
          %p489 = pneg %p106
        $region42: #{norm_head.1} parent=39 // pred_check_branch
          %491 = sbr.rel (%p489) target = $region44
        $region43: #{norm_head.1} parent=39 // pred_region
          %s492 = sand.u32 %s91, 1
          %s493 = scalar_lea.sflag [#allocation4], %s492
          %s494 = sand.u32 %s91, 1
          %s495 = smul.addr %s494, 8
          %s496 = scalar_lea.vmem [#allocation3], %s495
          %497 = dma.done %s493, 128
        $region44: #{norm_head.1} parent=39 // pred_fallthru
          _
      $region40: #{norm_head.1} parent=5 // pred_fallthru
        _
    $region6: #{norm_head.1} parent=1 // loop_footer
      %s15 = sadd.s32 1, %s11
    $region7: #{norm_head.1} parent=1 // loop_footer_branch
      %10 = sbr.rel target = $region3
    $region8: #{norm_head.1} parent=1 // loop_exit
      _
    %498 = vsyncpa [#allocation4], 1
    %s499 = scalar_lea.sflag [#allocation4], 1
    %500 = vsyncpa %s499, 1

</llo_original>
